<compile_context>
chip_gen: v7x
topology: tpu7x:2x2x1
jax: 0.10.0
libtpu: 0.0.40
codegen_flags: <defaults>
</compile_context>

<pallas_src>
import jax
import jax.numpy as jnp
import numpy as np
from jax.experimental import pallas as pl
from jax.experimental.pallas import tpu as pltpu

NEG_SLOPE = 0.01  # nn.LeakyReLU default
_LANES = 128


def _round_up(n, m):
    return ((n + m - 1) // m) * m


def _leaky_relu(z):
    return jnp.where(z > 0, z, NEG_SLOPE * z)


# ---------------------------------------------------------------------------
# Parameter layout: one contiguous (rows, 128) f32 buffer.
#   * weight segments start at 8-row-aligned offsets, lanes 0..c
#   * all bias / vector rows are packed consecutively in one 16-row segment
# ---------------------------------------------------------------------------
def make_layout(input_dim, latent_dim, hidden_dim):
    d2, d4 = input_dim // 2, input_dim // 4
    lat2 = latent_dim // 2
    wsegs = [  # (name, rows [in], cols [out])
        ("ew1", input_dim, d2),
        ("ew2", d2, d4),
        ("ew3", d4, hidden_dim),
        ("wfold", hidden_dim, latent_dim),            # v_proj @ out_proj @ enc_out
        ("wenc", latent_dim, hidden_dim + d4 + lat2), # [sw1 | dw1 | rw1]
        ("dw2", d4, d2),
        ("wtail", hidden_dim + d2, 2 * input_dim),    # blockdiag(sw2, dw3)
    ]
    bsegs = [  # single rows, packed consecutively
        ("eb1", d2), ("eb2", d4), ("eb3", hidden_dim), ("bfold", latent_dim),
        ("benc", hidden_dim + d4 + lat2), ("db2", d2), ("btail", 2 * input_dim),
        ("rw2t", lat2), ("rb2", 1),
    ]
    layout, off, max_cols = {}, 0, 0
    for name, r, c in wsegs:
        layout[name] = (off, r, c)
        off += _round_up(r, 8)
        max_cols = max(max_cols, c)
    for i, (name, c) in enumerate(bsegs):
        layout[name] = (off + i, 1, c)
        max_cols = max(max_cols, c)
    off += _round_up(len(bsegs), 8)
    lanes = _round_up(max_cols, _LANES)
    return layout, off, lanes


def pack_params(params, input_dim, latent_dim, hidden_dim):
    """Fold/fuse the linear chains and pack everything into one lane-aligned
    f32 buffer.  Host-side, done once per weight set."""
    (ew1, eb1, ew2, eb2, ew3, eb3,
     wqkv, bqkv, wo, bo,
     ow, ob,
     sw1, sb1, sw2, sb2,
     dw1, db1, dw2, db2, dw3, db3,
     rw1, rb1, rw2, rb2) = [np.asarray(p, np.float32) for p in params]

    H = hidden_dim
    d2 = input_dim // 2

    # NOTE: wqkv here is stored [in, 3H] with column order q|k|v.  PyTorch's
    # nn.MultiheadAttention.in_proj_weight is [3H, in] (row-packed); transpose
    # before slicing when importing a real checkpoint.
    wv = wqkv[:, 2 * H:3 * H]
    bv = bqkv[:, 2 * H:3 * H]
    # seq_len == 1 -> attention == out_proj(v_proj(h)); fold with encoder_out.
    wfold = wv @ wo @ ow
    bfold = (bv @ wo + bo) @ ow + ob

    # Heads of the three branches that consume `enc` (all followed by LeakyReLU).
    wenc = np.concatenate([sw1, dw1, rw1], axis=1)
    benc = np.concatenate([sb1, db1, rb1], axis=1)

    # Tail matmuls of both decoders as one block-diagonal weight -> [d1 | d2].
    wtail = np.zeros((hidden_dim + d2, 2 * input_dim), np.float32)
    wtail[:hidden_dim, :input_dim] = sw2
    wtail[hidden_dim:, input_dim:] = dw3
    btail = np.concatenate([sb2, db3], axis=1)

    layout, total_rows, lanes = make_layout(input_dim, latent_dim, hidden_dim)
    entries = {
        "ew1": ew1, "ew2": ew2, "ew3": ew3, "wfold": wfold,
        "wenc": wenc, "dw2": dw2, "wtail": wtail,
        "eb1": eb1, "eb2": eb2, "eb3": eb3, "bfold": bfold,
        "benc": benc, "db2": db2, "btail": btail,
        "rw2t": rw2.T, "rb2": rb2,
    }
    packed = np.zeros((total_rows, lanes), np.float32)
    for name, arr in entries.items():
        off, r, c = layout[name]
        assert arr.shape == (r, c), (name, arr.shape, (r, c))
        packed[off:off + r, :c] = arr
    return jnp.asarray(packed), layout, total_rows, lanes


# ---------------------------------------------------------------------------
# Kernel
# ---------------------------------------------------------------------------
def make_kernel(layout, input_dim, latent_dim, hidden_dim):
    d2, d4 = input_dim // 2, input_dim // 4
    lat2 = latent_dim // 2

    def kernel(x_ref, p_ref, o0_ref, o1_ref):
        f32 = jnp.float32

        def W(name):                       # [in, out] weight (static slice)
            off, r, c = layout[name]
            return p_ref[off:off + r, :c]

        def Bv(name):                      # [1, out] bias row (static slice)
            off, _, c = layout[name]
            return p_ref[off:off + 1, :c]

        def lin(a, wname, bname):
            return jnp.dot(a, W(wname), preferred_element_type=f32) + Bv(bname)

        x = x_ref[...].astype(f32)

        # ---- encoder MLP ----
        h = _leaky_relu(lin(x, "ew1", "eb1"))
        h = _leaky_relu(lin(h, "ew2", "eb2"))
        h = _leaky_relu(lin(h, "ew3", "eb3"))

        # ---- attention (seq_len==1) + encoder_out, folded into one matmul ----
        enc = _leaky_relu(lin(h, "wfold", "bfold"))

        # ---- fused heads of shallow decoder / deep decoder / regressor ----
        z = _leaky_relu(lin(enc, "wenc", "benc"))
        sh = z[:, :hidden_dim]                          # shallow-decoder hidden
        t1 = z[:, hidden_dim:hidden_dim + d4]           # deep-decoder layer 1
        r = z[:, hidden_dim + d4:hidden_dim + d4 + lat2]  # regressor hidden

        # deep decoder middle layer
        t = _leaky_relu(lin(t1, "dw2", "db2"))

        # ---- fused tail: block-diagonal weight -> lane-dense [d1 | d2] ----
        d12 = lin(jnp.concatenate([sh, t], axis=-1), "wtail", "btail")

        # ---- regressor tail: 1 output column -> VPU multiply + lane reduce ----
        pred = jnp.maximum(
            jnp.sum(r * Bv("rw2t"), axis=-1, keepdims=True) + Bv("rb2"), 0.0)

        # ---- stores: no zero padding materialized; trailing lanes of out1
        #      are left unwritten (wrapper slices them off) ----
        o0_ref[...] = d12.astype(o0_ref.dtype)
        o1_ref[:, :latent_dim + 1] = jnp.concatenate(
            [enc, pred], axis=-1).astype(o1_ref.dtype)

    return kernel


# ---------------------------------------------------------------------------
# Wrapper
# ---------------------------------------------------------------------------
def attention_ae_end(x, packed, layout, total_rows, lanes, *,
                     input_dim, latent_dim, hidden_dim,
                     io_dtype=jnp.float32):
    assert x.ndim == 2 and x.shape[1] == input_dim
    B = x.shape[0]
    out0_w = 2 * input_dim                      # [d1 | d2], lane-dense
    out1_w = _round_up(latent_dim + 1, 8)       # [enc | pred | garbage]

    Bp8 = _round_up(B, 8)
    if Bp8 <= 8:
        tile_b = Bp8                            # single tile; launch-bound regime
    else:
        # big tiles (low per-step overhead) but >= 2 grid steps so both
        # TensorCores are used on v7x
        tile_b = min(2048, _round_up((Bp8 + 1) // 2, 8))
    Bp = _round_up(Bp8, tile_b)

    xi = x.astype(io_dtype)
    if Bp != B:
        xi = jnp.pad(xi, ((0, Bp - B), (0, 0)))

    kernel = make_kernel(layout, input_dim, latent_dim, hidden_dim)
    o0, o1 = pl.pallas_call(
        kernel,
        out_shape=(jax.ShapeDtypeStruct((Bp, out0_w), io_dtype),
                   jax.ShapeDtypeStruct((Bp, out1_w), io_dtype)),
        grid=(Bp // tile_b,),
        in_specs=[
            pl.BlockSpec((tile_b, input_dim), lambda i: (i, 0)),   # batch tiles
            pl.BlockSpec((total_rows, lanes), lambda i: (0, 0)),   # resident weights
        ],
        out_specs=[
            pl.BlockSpec((tile_b, out0_w), lambda i: (i, 0)),
            pl.BlockSpec((tile_b, out1_w), lambda i: (i, 0)),
        ],
        compiler_params=pltpu.CompilerParams(
            dimension_semantics=("parallel",)),   # shard batch grid across TCs
    )(xi, packed)

    o0 = o0[:B].astype(jnp.float32)
    o1 = o1[:B].astype(jnp.float32)
    decoded1 = o0[:, :input_dim]
    decoded2 = o0[:, input_dim:2 * input_dim]
    encoded = o1[:, :latent_dim]
    pred = o1[:, latent_dim:latent_dim + 1]
    return encoded, decoded1, decoded2, pred


# ---------------------------------------------------------------------------
# Synthetic params + pure-JAX reference (full per-head softmax attention)
# ---------------------------------------------------------------------------
def make_params(key, input_dim, latent_dim, hidden_dim):
    """Deterministic synthetic parameters; weights stored [in, out]."""
    ks = list(jax.random.split(key, 32))

    def lin(i, fan_in, fan_out):
        scale = 1.0 / jnp.sqrt(jnp.float32(fan_in))
        w = jax.random.normal(ks[2 * i], (fan_in, fan_out), jnp.float32) * scale
        b = jax.random.normal(ks[2 * i + 1], (1, fan_out), jnp.float32) * scale
        return w, b

    d2, d4 = input_dim // 2, input_dim // 4
    ew1, eb1 = lin(0, input_dim, d2)
    ew2, eb2 = lin(1, d2, d4)
    ew3, eb3 = lin(2, d4, hidden_dim)
    wqkv, bqkv = lin(3, hidden_dim, 3 * hidden_dim)   # in_proj (q|k|v concat)
    wo, bo = lin(4, hidden_dim, hidden_dim)           # out_proj
    ow, ob = lin(5, hidden_dim, latent_dim)
    sw1, sb1 = lin(6, latent_dim, hidden_dim)
    sw2, sb2 = lin(7, hidden_dim, input_dim)
    dw1, db1 = lin(8, latent_dim, d4)
    dw2, db2 = lin(9, d4, d2)
    dw3, db3 = lin(10, d2, input_dim)
    rw1, rb1 = lin(11, latent_dim, latent_dim // 2)
    rw2, rb2 = lin(12, latent_dim // 2, 1)
    return (ew1, eb1, ew2, eb2, ew3, eb3,
            wqkv, bqkv, wo, bo,
            ow, ob,
            sw1, sb1, sw2, sb2,
            dw1, db1, dw2, db2, dw3, db3,
            rw1, rb1, rw2, rb2)


def ref_forward(x, params, num_heads):
    """Pure-JAX reference including the full per-head softmax attention."""
    (ew1, eb1, ew2, eb2, ew3, eb3,
     wqkv, bqkv, wo, bo,
     ow, ob,
     sw1, sb1, sw2, sb2,
     dw1, db1, dw2, db2, dw3, db3,
     rw1, rb1, rw2, rb2) = params
    lr = lambda z: jnp.where(z > 0, z, NEG_SLOPE * z)

    h = lr(x @ ew1 + eb1)
    h = lr(h @ ew2 + eb2)
    h = lr(h @ ew3 + eb3)

    B, H = h.shape
    dh = H // num_heads
    s = h[:, None, :]                                   # [B, 1, H]
    qkv = s @ wqkv + bqkv                               # [B, 1, 3H]
    q, k, v = qkv[..., :H], qkv[..., H:2 * H], qkv[..., 2 * H:]
    q = q.reshape(B, 1, num_heads, dh).transpose(0, 2, 1, 3)
    k = k.reshape(B, 1, num_heads, dh).transpose(0, 2, 1, 3)
    v = v.reshape(B, 1, num_heads, dh).transpose(0, 2, 1, 3)
    scores = (q @ k.transpose(0, 1, 3, 2)) / jnp.sqrt(jnp.float32(dh))
    w = jax.nn.softmax(scores, axis=-1)
    a = (w @ v).transpose(0, 2, 1, 3).reshape(B, 1, H)
    attn = (a @ wo + bo)[:, 0, :]

    enc = lr(attn @ ow + ob)
    d1 = lr(enc @ sw1 + sb1) @ sw2 + sb2
    d2 = lr(lr(enc @ dw1 + db1) @ dw2 + db2) @ dw3 + db3
    p = jnp.maximum(lr(enc @ rw1 + rb1) @ rw2 + rb2, 0.0)
    return enc, d1, d2, p


if __name__ == "__main__":
    INPUT_DIM = 64
    HIDDEN_DIM = 32
    LATENT_DIM = 16
    NUM_HEADS = 4
    BATCH = 8

    key = jax.random.PRNGKey(0)
    kx, kp, kx2 = jax.random.split(key, 3)
    params = make_params(kp, INPUT_DIM, LATENT_DIM, HIDDEN_DIM)
    packed, layout, total_rows, lanes = pack_params(
        params, INPUT_DIM, LATENT_DIM, HIDDEN_DIM)

    def run_and_check(x):
        outs = attention_ae_end(x, packed, layout, total_rows, lanes,
                                input_dim=INPUT_DIM, latent_dim=LATENT_DIM,
                                hidden_dim=HIDDEN_DIM)
        outs = jax.block_until_ready(outs)
        refs = ref_forward(x, params, NUM_HEADS)
        for o, r in zip(outs, refs):
            assert o.shape == r.shape, (o.shape, r.shape)
            assert jnp.allclose(o, r, atol=1e-4, rtol=1e-4), \
                float(jnp.max(jnp.abs(o - r)))
        return outs

    # single-tile (grid=(1,)) case
    x = jax.random.normal(kx, (BATCH, INPUT_DIM), jnp.float32)
    run_and_check(x)

    # multi-tile case (exercises batch padding + 2-program grid / both TCs)
    x2 = jax.random.normal(kx2, (40, INPUT_DIM), jnp.float32)
    run_and_check(x2)

    print("KERNEL_OK")
</pallas_src>

<mosaic_0001>
module attributes {stable_mosaic.version = 11 : i64} {
  func.func @kernel(%arg0: i32, %arg1: memref<8x64xf32, #tpu.memory_space<vmem>>, %arg2: memref<256x128xf32, #tpu.memory_space<vmem>>, %arg3: memref<8x128xf32, #tpu.memory_space<vmem>>, %arg4: memref<8x24xf32, #tpu.memory_space<vmem>>) attributes {dimension_semantics = [#tpu.dimension_semantics<parallel>], iteration_bounds = array<i64: 1>, scalar_prefetch = 0 : i64, scratch_operands = 0 : i64, tpu.core_type = #tpu.core_type<tc>, window_params = [{transform_indices = @transform_0, window_bounds = array<i64: 8, 64>}, {pipeline_mode = #tpu.pipeline_mode<synchronous>, transform_indices = @transform_1, window_bounds = array<i64: 256, 128>}, {transform_indices = @transform_2, window_bounds = array<i64: 8, 128>}, {transform_indices = @transform_3, window_bounds = array<i64: 8, 24>}]} {
    %c0 = arith.constant 0 : index
    %c0_0 = arith.constant 0 : index
    %0 = vector.load %arg1[%c0, %c0_0] : memref<8x64xf32, #tpu.memory_space<vmem>>, vector<8x64xf32>
    %c0_1 = arith.constant 0 : index
    %c0_2 = arith.constant 0 : index
    %1 = vector.load %arg2[%c0_1, %c0_2] : memref<256x128xf32, #tpu.memory_space<vmem>>, vector<64x32xf32>
    %cst = arith.constant dense<0.000000e+00> : vector<8x32xf32>
    %2 = tpu.matmul %0, %1, %cst {dimension_numbers = #tpu.dot_dimension_numbers<[1], [0], [0], [1], [0, 0, 1, 1], [], []>} : vector<8x64xf32>, vector<64x32xf32>, vector<8x32xf32> -> vector<8x32xf32>
    %c240 = arith.constant 240 : index
    %c0_3 = arith.constant 0 : index
    %3 = vector.load %arg2[%c240, %c0_3] : memref<256x128xf32, #tpu.memory_space<vmem>>, vector<1x32xf32>
    %4 = vector.broadcast %3 : vector<1x32xf32> to vector<8x32xf32>
    %5 = arith.addf %2, %4 : vector<8x32xf32>
    %cst_4 = arith.constant 0.000000e+00 : f32
    %6 = vector.broadcast %cst_4 : f32 to vector<8x32xf32>
    %7 = arith.cmpf ogt, %5, %6 : vector<8x32xf32>
    %cst_5 = arith.constant 0.00999999977 : f32
    %8 = vector.broadcast %cst_5 : f32 to vector<8x32xf32>
    %9 = arith.mulf %8, %5 : vector<8x32xf32>
    %10 = arith.select %7, %5, %9 : vector<8x32xi1>, vector<8x32xf32>
    %c64 = arith.constant 64 : index
    %c0_6 = arith.constant 0 : index
    %11 = vector.load %arg2[%c64, %c0_6] : memref<256x128xf32, #tpu.memory_space<vmem>>, vector<32x16xf32>
    %cst_7 = arith.constant dense<0.000000e+00> : vector<8x16xf32>
    %12 = tpu.matmul %10, %11, %cst_7 {dimension_numbers = #tpu.dot_dimension_numbers<[1], [0], [0], [1], [0, 0, 1, 1], [], []>} : vector<8x32xf32>, vector<32x16xf32>, vector<8x16xf32> -> vector<8x16xf32>
    %c241 = arith.constant 241 : index
    %c0_8 = arith.constant 0 : index
    %13 = vector.load %arg2[%c241, %c0_8] : memref<256x128xf32, #tpu.memory_space<vmem>>, vector<1x16xf32>
    %14 = vector.broadcast %13 : vector<1x16xf32> to vector<8x16xf32>
    %15 = arith.addf %12, %14 : vector<8x16xf32>
    %cst_9 = arith.constant 0.000000e+00 : f32
    %16 = vector.broadcast %cst_9 : f32 to vector<8x16xf32>
    %17 = arith.cmpf ogt, %15, %16 : vector<8x16xf32>
    %cst_10 = arith.constant 0.00999999977 : f32
    %18 = vector.broadcast %cst_10 : f32 to vector<8x16xf32>
    %19 = arith.mulf %18, %15 : vector<8x16xf32>
    %20 = arith.select %17, %15, %19 : vector<8x16xi1>, vector<8x16xf32>
    %c96 = arith.constant 96 : index
    %c0_11 = arith.constant 0 : index
    %21 = vector.load %arg2[%c96, %c0_11] : memref<256x128xf32, #tpu.memory_space<vmem>>, vector<16x32xf32>
    %cst_12 = arith.constant dense<0.000000e+00> : vector<8x32xf32>
    %22 = tpu.matmul %20, %21, %cst_12 {dimension_numbers = #tpu.dot_dimension_numbers<[1], [0], [0], [1], [0, 0, 1, 1], [], []>} : vector<8x16xf32>, vector<16x32xf32>, vector<8x32xf32> -> vector<8x32xf32>
    %c242 = arith.constant 242 : index
    %c0_13 = arith.constant 0 : index
    %23 = vector.load %arg2[%c242, %c0_13] : memref<256x128xf32, #tpu.memory_space<vmem>>, vector<1x32xf32>
    %24 = vector.broadcast %23 : vector<1x32xf32> to vector<8x32xf32>
    %25 = arith.addf %22, %24 : vector<8x32xf32>
    %cst_14 = arith.constant 0.000000e+00 : f32
    %26 = vector.broadcast %cst_14 : f32 to vector<8x32xf32>
    %27 = arith.cmpf ogt, %25, %26 : vector<8x32xf32>
    %cst_15 = arith.constant 0.00999999977 : f32
    %28 = vector.broadcast %cst_15 : f32 to vector<8x32xf32>
    %29 = arith.mulf %28, %25 : vector<8x32xf32>
    %30 = arith.select %27, %25, %29 : vector<8x32xi1>, vector<8x32xf32>
    %c112 = arith.constant 112 : index
    %c0_16 = arith.constant 0 : index
    %31 = vector.load %arg2[%c112, %c0_16] : memref<256x128xf32, #tpu.memory_space<vmem>>, vector<32x16xf32>
    %cst_17 = arith.constant dense<0.000000e+00> : vector<8x16xf32>
    %32 = tpu.matmul %30, %31, %cst_17 {dimension_numbers = #tpu.dot_dimension_numbers<[1], [0], [0], [1], [0, 0, 1, 1], [], []>} : vector<8x32xf32>, vector<32x16xf32>, vector<8x16xf32> -> vector<8x16xf32>
    %c243 = arith.constant 243 : index
    %c0_18 = arith.constant 0 : index
    %33 = vector.load %arg2[%c243, %c0_18] : memref<256x128xf32, #tpu.memory_space<vmem>>, vector<1x16xf32>
    %34 = vector.broadcast %33 : vector<1x16xf32> to vector<8x16xf32>
    %35 = arith.addf %32, %34 : vector<8x16xf32>
    %cst_19 = arith.constant 0.000000e+00 : f32
    %36 = vector.broadcast %cst_19 : f32 to vector<8x16xf32>
    %37 = arith.cmpf ogt, %35, %36 : vector<8x16xf32>
    %cst_20 = arith.constant 0.00999999977 : f32
    %38 = vector.broadcast %cst_20 : f32 to vector<8x16xf32>
    %39 = arith.mulf %38, %35 : vector<8x16xf32>
    %40 = arith.select %37, %35, %39 : vector<8x16xi1>, vector<8x16xf32>
    %c144 = arith.constant 144 : index
    %c0_21 = arith.constant 0 : index
    %41 = vector.load %arg2[%c144, %c0_21] : memref<256x128xf32, #tpu.memory_space<vmem>>, vector<16x56xf32>
    %cst_22 = arith.constant dense<0.000000e+00> : vector<8x56xf32>
    %42 = tpu.matmul %40, %41, %cst_22 {dimension_numbers = #tpu.dot_dimension_numbers<[1], [0], [0], [1], [0, 0, 1, 1], [], []>} : vector<8x16xf32>, vector<16x56xf32>, vector<8x56xf32> -> vector<8x56xf32>
    %c244 = arith.constant 244 : index
    %c0_23 = arith.constant 0 : index
    %43 = vector.load %arg2[%c244, %c0_23] : memref<256x128xf32, #tpu.memory_space<vmem>>, vector<1x56xf32>
    %44 = vector.broadcast %43 : vector<1x56xf32> to vector<8x56xf32>
    %45 = arith.addf %42, %44 : vector<8x56xf32>
    %cst_24 = arith.constant 0.000000e+00 : f32
    %46 = vector.broadcast %cst_24 : f32 to vector<8x56xf32>
    %47 = arith.cmpf ogt, %45, %46 : vector<8x56xf32>
    %cst_25 = arith.constant 0.00999999977 : f32
    %48 = vector.broadcast %cst_25 : f32 to vector<8x56xf32>
    %49 = arith.mulf %48, %45 : vector<8x56xf32>
    %50 = arith.select %47, %45, %49 : vector<8x56xi1>, vector<8x56xf32>
    %51 = vector.extract_strided_slice %50 {offsets = [0, 0], sizes = [8, 32], strides = [1, 1]} : vector<8x56xf32> to vector<8x32xf32>
    %52 = vector.extract_strided_slice %50 {offsets = [0, 32], sizes = [8, 16], strides = [1, 1]} : vector<8x56xf32> to vector<8x16xf32>
    %53 = vector.extract_strided_slice %50 {offsets = [0, 48], sizes = [8, 8], strides = [1, 1]} : vector<8x56xf32> to vector<8x8xf32>
    %c160 = arith.constant 160 : index
    %c0_26 = arith.constant 0 : index
    %54 = vector.load %arg2[%c160, %c0_26] : memref<256x128xf32, #tpu.memory_space<vmem>>, vector<16x32xf32>
    %cst_27 = arith.constant dense<0.000000e+00> : vector<8x32xf32>
    %55 = tpu.matmul %52, %54, %cst_27 {dimension_numbers = #tpu.dot_dimension_numbers<[1], [0], [0], [1], [0, 0, 1, 1], [], []>} : vector<8x16xf32>, vector<16x32xf32>, vector<8x32xf32> -> vector<8x32xf32>
    %c245 = arith.constant 245 : index
    %c0_28 = arith.constant 0 : index
    %56 = vector.load %arg2[%c245, %c0_28] : memref<256x128xf32, #tpu.memory_space<vmem>>, vector<1x32xf32>
    %57 = vector.broadcast %56 : vector<1x32xf32> to vector<8x32xf32>
    %58 = arith.addf %55, %57 : vector<8x32xf32>
    %cst_29 = arith.constant 0.000000e+00 : f32
    %59 = vector.broadcast %cst_29 : f32 to vector<8x32xf32>
    %60 = arith.cmpf ogt, %58, %59 : vector<8x32xf32>
    %cst_30 = arith.constant 0.00999999977 : f32
    %61 = vector.broadcast %cst_30 : f32 to vector<8x32xf32>
    %62 = arith.mulf %61, %58 : vector<8x32xf32>
    %63 = arith.select %60, %58, %62 : vector<8x32xi1>, vector<8x32xf32>
    %64 = tpu.concatenate %51, %63 in 1 : vector<8x32xf32>, vector<8x32xf32> -> vector<8x64xf32>
    %c176 = arith.constant 176 : index
    %c0_31 = arith.constant 0 : index
    %65 = vector.load %arg2[%c176, %c0_31] : memref<256x128xf32, #tpu.memory_space<vmem>>, vector<64x128xf32>
    %cst_32 = arith.constant dense<0.000000e+00> : vector<8x128xf32>
    %66 = tpu.matmul %64, %65, %cst_32 {dimension_numbers = #tpu.dot_dimension_numbers<[1], [0], [0], [1], [0, 0, 1, 1], [], []>} : vector<8x64xf32>, vector<64x128xf32>, vector<8x128xf32> -> vector<8x128xf32>
    %c246 = arith.constant 246 : index
    %c0_33 = arith.constant 0 : index
    %67 = vector.load %arg2[%c246, %c0_33] : memref<256x128xf32, #tpu.memory_space<vmem>>, vector<1x128xf32>
    %68 = vector.broadcast %67 : vector<1x128xf32> to vector<8x128xf32>
    %69 = arith.addf %66, %68 : vector<8x128xf32>
    %c247 = arith.constant 247 : index
    %c0_34 = arith.constant 0 : index
    %70 = vector.load %arg2[%c247, %c0_34] : memref<256x128xf32, #tpu.memory_space<vmem>>, vector<1x8xf32>
    %71 = vector.broadcast %70 : vector<1x8xf32> to vector<8x8xf32>
    %72 = arith.mulf %53, %71 : vector<8x8xf32>
    %cst_35 = arith.constant dense<0.000000e+00> : vector<8xf32>
    %73 = vector.multi_reduction <add>, %72, %cst_35 [1] : vector<8x8xf32> to vector<8xf32>
    %74 = vector.shape_cast %73 : vector<8xf32> to vector<8x1xf32>
    %c248 = arith.constant 248 : index
    %c0_36 = arith.constant 0 : index
    %75 = vector.load %arg2[%c248, %c0_36] : memref<256x128xf32, #tpu.memory_space<vmem>>, vector<1x1xf32>
    %76 = vector.broadcast %75 : vector<1x1xf32> to vector<8x1xf32>
    %77 = arith.addf %74, %76 : vector<8x1xf32>
    %cst_37 = arith.constant 0.000000e+00 : f32
    %78 = vector.broadcast %cst_37 : f32 to vector<8x1xf32>
    %79 = arith.maximumf %77, %78 : vector<8x1xf32>
    %c0_38 = arith.constant 0 : index
    %c0_39 = arith.constant 0 : index
    %80 = vector.load %arg3[%c0_38, %c0_39] : memref<8x128xf32, #tpu.memory_space<vmem>>, vector<8x128xf32>
    tpu.vector_store %arg3[%c0_38, %c0_39], %69 {strides = array<i32>} : memref<8x128xf32, #tpu.memory_space<vmem>>, vector<8x128xf32>,
    %81 = tpu.concatenate %40, %79 in 1 : vector<8x16xf32>, vector<8x1xf32> -> vector<8x17xf32>
    %c0_40 = arith.constant 0 : index
    %c0_41 = arith.constant 0 : index
    %82 = vector.load %arg4[%c0_40, %c0_41] : memref<8x24xf32, #tpu.memory_space<vmem>>, vector<8x17xf32>
    tpu.vector_store %arg4[%c0_40, %c0_41], %81 {strides = array<i32>} : memref<8x24xf32, #tpu.memory_space<vmem>>, vector<8x17xf32>,
    return
  }
  func.func @transform_0(%arg0: i32) -> (i32, i32) {
    %c0_i32 = arith.constant 0 : i32
    %c0_i32_0 = arith.constant 0 : i32
    return %arg0, %c0_i32 : i32, i32
  }
  func.func @transform_1(%arg0: i32) -> (i32, i32) {
    %c0_i32 = arith.constant 0 : i32
    %c0_i32_0 = arith.constant 0 : i32
    %c0_i32_1 = arith.constant 0 : i32
    return %c0_i32, %c0_i32_0 : i32, i32
  }
  func.func @transform_2(%arg0: i32) -> (i32, i32) {
    %c0_i32 = arith.constant 0 : i32
    %c0_i32_0 = arith.constant 0 : i32
    return %arg0, %c0_i32 : i32, i32
  }
  func.func @transform_3(%arg0: i32) -> (i32, i32) {
    %c0_i32 = arith.constant 0 : i32
    %c0_i32_0 = arith.constant 0 : i32
    return %arg0, %c0_i32 : i32, i32
  }
}

</mosaic_0001>

<llo_original>
// kernel: tpu_custom_call.1
$region0: #{tpu_custom_call.1}
  #allocation0 [shape = 'u32[]', space=smem, size = 0x4, offset = 0x4, fixed_abs, tag = 'smem constant byte address 0x4 - core index']
  #allocation1 [shape = 'u32[144,128]{1,0:T(1,128)}', space=vmem, size = 0x12000, scoped, tag = 'internal scratch']
  %s0 = inlined_call_operand.hbm [shape: f32[8,64], index: 0, kind: input, shape index: {}]
  %s1 = inlined_call_operand.hbm [shape: f32[256,128], index: 1, kind: input, shape index: {}]
  %s2 = inlined_call_operand.hbm [shape: f32[8,128], index: 2, kind: output, shape index: {0}]
  %s3 = inlined_call_operand.hbm [shape: f32[8,24], index: 3, kind: output, shape index: {1}]
  %4 = xla_tuple %s2, %s3
  %s5 = sld [smem:[#allocation0]]
  $region34: #{tpu_custom_call.1} parent=0
    _
  %s7 = ssub.s32 1, %s5
  %s8 = scalar_select 0, %s7, %s5
  $region1: #{tpu_custom_call.1} parent=0
    #allocation2 [shape = 'u8[4096]{0}', space=vmem, size = 0x1000, scoped, tag = 'input window, operand 0, single buffered']
    #allocation3 [shape = 's32[1]{0}', space=sflag, size = 0x4, scoped, tag = 'scoped memory for tpu_custom_call.1']
    #allocation4 [shape = 's32[1]{0}', space=sflag, size = 0x4, scoped, tag = 'scoped memory for tpu_custom_call.1']
    #allocation5 [shape = 'u8[131072]{0}', space=vmem, size = 0x20000, scoped, tag = 'input window, operand 1, single buffered']
    #allocation6 [shape = 's32[1]{0}', space=sflag, size = 0x4, scoped, tag = 'scoped memory for tpu_custom_call.1']
    #allocation7 [shape = 'u8[4096]{0}', space=vmem, size = 0x1000, scoped, tag = 'output window, operand 0, single buffered']
    #allocation8 [shape = 'u8[4096]{0}', space=vmem, size = 0x1000, scoped, tag = 'output window, operand 1, single buffered']
    #allocation9 [shape = 's32[1]{0}', space=sflag, size = 0x4, scoped, tag = 'scoped memory for tpu_custom_call.1']
    %9 = vsyncpa [#allocation3], 0
    %10 = vsyncpa [#allocation6], 0
    %11 = vsyncpa [#allocation4], 0
    %12 = vsyncpa [#allocation9], 0
    // Predicated region
    $region2: #{tpu_custom_call.1} parent=1 // pred_check
      _
    $region3: #{tpu_custom_call.1} parent=1 // pred_check_branch
      %14 = sbr.rel (0) target = $region5
    $region4: #{tpu_custom_call.1} parent=1 // pred_region
      %s16 = ssub.s32 128, 128
      %17 = vsyncadd [#allocation3], %s16
      %s19 = sshll.u32 [#allocation2], 4
      %s20 = int_to_ptr.vmem [resolvable:$true] %s19
      %22 = dma.hbm_to_vmem [thread:$0]  %s0, 128, %s20, [#allocation3]
    $region5: #{tpu_custom_call.1} parent=1 // pred_fallthru
      _
    // Predicated region
    $region6: #{tpu_custom_call.1} parent=1 // pred_check
      _
    $region7: #{tpu_custom_call.1} parent=1 // pred_check_branch
      %24 = sbr.rel (0) target = $region9
    $region8: #{tpu_custom_call.1} parent=1 // pred_region
      %s26 = ssub.s32 4096, 4096
      %27 = vsyncadd [#allocation6], %s26
      %s28 = sshll.u32 [#allocation5], 4
      %s29 = int_to_ptr.vmem [resolvable:$true] %s28
      %34 = dma.hbm_to_vmem [thread:$0]  %s1, 4096, %s29, [#allocation6], 128, 128, 8
    $region9: #{tpu_custom_call.1} parent=1 // pred_fallthru
      _
    // Predicated region
    $region10: #{tpu_custom_call.1} parent=1 // pred_check
      _
    $region11: #{tpu_custom_call.1} parent=1 // pred_check_branch
      %36 = sbr.rel (0) target = $region13
    $region12: #{tpu_custom_call.1} parent=1 // pred_region
      %37 = dma.done [#allocation3], 128
    $region13: #{tpu_custom_call.1} parent=1 // pred_fallthru
      _
    // Predicated region
    $region14: #{tpu_custom_call.1} parent=1 // pred_check
      _
    $region15: #{tpu_custom_call.1} parent=1 // pred_check_branch
      %39 = sbr.rel (0) target = $region17
    $region16: #{tpu_custom_call.1} parent=1 // pred_region
      %40 = dma.done [#allocation6], 4096
    $region17: #{tpu_custom_call.1} parent=1 // pred_fallthru
      _
    %v41 = vld [vmem:[#allocation2] sm:$0xff]
    %v42 = vld [vmem:[#allocation5] sm:$0xff]
    %v43 = vld [vmem:[#allocation5 + $0x8] sm:$0xff]
    %v44 = vld [vmem:[#allocation5 + $0x10] sm:$0xff]
    %v45 = vld [vmem:[#allocation5 + $0x18] sm:$0xff]
    %v46 = vld [vmem:[#allocation5 + $0x20] sm:$0xff]
    %v47 = vld [vmem:[#allocation5 + $0x28] sm:$0xff]
    %v48 = vld [vmem:[#allocation5 + $0x30] sm:$0xff]
    %v49 = vld [vmem:[#allocation5 + $0x38] sm:$0xff]
    %v50 = vld [vmem:[#allocation5 + $0xf0] sm:$0x1]
    %v51 = vlaneseq
    %v52 = vshrl.u32 %v51, 7
    %v53 = vsub.s32 0, %v52
    %v54 = vrot.slane %v50, %v53
    %vm55 = vcmask 523264
    %v57 = vsel %vm55, %v41, 0
    %59 = vmatprep.subr.mxu0 0.0
    %60 = vmatpush1.msra.mxu0 %v42
    %61 = vmatprep.subr.mxu0 0.0
    %62 = vmatpush1.msra.mxu0 %v43
    %63 = vmatprep.subr.mxu0 0.0
    %64 = vmatpush1.msra.mxu0 %v44
    %65 = vmatprep.subr.mxu0 0.0
    %66 = vmatpush1.msra.mxu0 %v45
    %67 = vmatprep.subr.mxu0 0.0
    %68 = vmatpush1.msra.mxu0 %v46
    %69 = vmatprep.subr.mxu0 0.0
    %70 = vmatpush1.msra.mxu0 %v47
    %71 = vmatprep.subr.mxu0 0.0
    %72 = vmatpush1.msra.mxu0 %v48
    %73 = vmatprep.subr.mxu0 0.0
    %74 = vmatpush1.msra.mxu0 %v49
    %75 = vmatprep.subr.mxu0 0.0
    %76 = vmatpush1.msra.mxu0 0.0
    %77 = vmatprep.subr.mxu0 0.0
    %78 = vmatpush1.msra.mxu0 0.0
    %79 = vmatprep.subr.mxu0 0.0
    %80 = vmatpush1.msra.mxu0 0.0
    %81 = vmatprep.subr.mxu0 0.0
    %82 = vmatpush1.msra.mxu0 0.0
    %83 = vmatprep.subr.mxu0 0.0
    %84 = vmatpush1.msra.mxu0 0.0
    %85 = vmatprep.subr.mxu0 0.0
    %86 = vmatpush1.msra.mxu0 0.0
    %87 = vmatprep.subr.mxu0 0.0
    %88 = vmatpush1.msra.mxu0 0.0
    %89 = vmatprep.subr.mxu0 0.0
    %90 = vmatpush1.msra.mxu0 0.0
    %91 = vmatprep.subr.mxu0 0.0
    %92 = vmatpush1.msra.mxu0 0.0
    %93 = vmatprep.subr.mxu0 0.0
    %94 = vmatpush1.msra.mxu0 0.0
    %95 = vmatprep.subr.mxu0 0.0
    %96 = vmatpush1.msra.mxu0 0.0
    %97 = vmatprep.subr.mxu0 0.0
    %98 = vmatpush1.msra.mxu0 0.0
    %99 = vmatprep.subr.mxu0 0.0
    %100 = vmatpush1.msra.mxu0 0.0
    %101 = vmatprep.subr.mxu0 0.0
    %102 = vmatpush1.msra.mxu0 0.0
    %103 = vmatprep.subr.mxu0 0.0
    %104 = vmatpush1.msra.mxu0 0.0
    %105 = vmatprep.subr.mxu0 0.0
    %106 = vmatpush1.msra.mxu0 0.0
    %107 = vmatprep.subr.mxu0 0.0
    %108 = vmatpush1.msra.mxu0 0.0
    %109 = vmatprep.subr.mxu0 0.0
    %110 = vmatpush1.msra.mxu0 0.0
    %111 = vmatprep.subr.mxu0 0.0
    %112 = vmatpush1.msra.mxu0 0.0
    %113 = vmatprep.subr.mxu0 0.0
    %114 = vmatpush1.msra.mxu0 0.0
    %115 = vmatprep.subr.mxu0 0.0
    %116 = vmatpush1.msra.mxu0 0.0
    %117 = vmatprep.subr.mxu0 0.0
    %118 = vmatpush1.msra.mxu0 0.0
    %119 = vmatprep.subr.mxu0 0.0
    %120 = vmatpush1.msra.mxu0 0.0
    %121 = vmatprep.subr.mxu0 0.0
    %122 = vmatpush1.msra.mxu0 0.0
    %123 = vmatprep.mubr.f32.mxu0 0.0
    %124 = vmatmul.mubr.f32.gmra.mrb[0].mxu0 %v57
    %v125 = vpop.f32.mrb[0].mxu0
    %v126 = vadd.f32 %v54, %v125
    %v127 = vpop.f32.mrb[0].mxu0
    %128 = vdwg.mxu0
    %vm129 = vcmp.gt.f32.partialorder %v126, 0.0
    %v130 = vmul.f32 %v126, 0.01
    %v131 = vsel %vm129, %v126, %v130
    %v132 = vld [vmem:[#allocation5 + $0x40] sm:$0xff]
    %v133 = vld [vmem:[#allocation5 + $0x48] sm:$0xff]
    %v134 = vld [vmem:[#allocation5 + $0x50] sm:$0xff]
    %v135 = vld [vmem:[#allocation5 + $0x58] sm:$0xff]
    %v136 = vld [vmem:[#allocation5 + $0xf1] sm:$0x1]
    %v137 = vlaneseq
    %v138 = vshrl.u32 %v137, 7
    %v139 = vsub.s32 0, %v138
    %v140 = vrot.slane %v136, %v139
    %vm141 = vcmask 261120
    %v143 = vsel %vm141, %v131, 0
    %145 = vmatprep.subr.mxu0 0.0
    %146 = vmatpush1.msra.mxu0 %v132
    %147 = vmatprep.subr.mxu0 0.0
    %148 = vmatpush1.msra.mxu0 %v133
    %149 = vmatprep.subr.mxu0 0.0
    %150 = vmatpush1.msra.mxu0 %v134
    %151 = vmatprep.subr.mxu0 0.0
    %152 = vmatpush1.msra.mxu0 %v135
    %153 = vmatprep.subr.mxu0 0.0
    %154 = vmatpush1.msra.mxu0 0.0
    %155 = vmatprep.subr.mxu0 0.0
    %156 = vmatpush1.msra.mxu0 0.0
    %157 = vmatprep.subr.mxu0 0.0
    %158 = vmatpush1.msra.mxu0 0.0
    %159 = vmatprep.subr.mxu0 0.0
    %160 = vmatpush1.msra.mxu0 0.0
    %161 = vmatprep.subr.mxu0 0.0
    %162 = vmatpush1.msra.mxu0 0.0
    %163 = vmatprep.subr.mxu0 0.0
    %164 = vmatpush1.msra.mxu0 0.0
    %165 = vmatprep.subr.mxu0 0.0
    %166 = vmatpush1.msra.mxu0 0.0
    %167 = vmatprep.subr.mxu0 0.0
    %168 = vmatpush1.msra.mxu0 0.0
    %169 = vmatprep.subr.mxu0 0.0
    %170 = vmatpush1.msra.mxu0 0.0
    %171 = vmatprep.subr.mxu0 0.0
    %172 = vmatpush1.msra.mxu0 0.0
    %173 = vmatprep.subr.mxu0 0.0
    %174 = vmatpush1.msra.mxu0 0.0
    %175 = vmatprep.subr.mxu0 0.0
    %176 = vmatpush1.msra.mxu0 0.0
    %177 = vmatprep.subr.mxu0 0.0
    %178 = vmatpush1.msra.mxu0 0.0
    %179 = vmatprep.subr.mxu0 0.0
    %180 = vmatpush1.msra.mxu0 0.0
    %181 = vmatprep.subr.mxu0 0.0
    %182 = vmatpush1.msra.mxu0 0.0
    %183 = vmatprep.subr.mxu0 0.0
    %184 = vmatpush1.msra.mxu0 0.0
    %185 = vmatprep.subr.mxu0 0.0
    %186 = vmatpush1.msra.mxu0 0.0
    %187 = vmatprep.subr.mxu0 0.0
    %188 = vmatpush1.msra.mxu0 0.0
    %189 = vmatprep.subr.mxu0 0.0
    %190 = vmatpush1.msra.mxu0 0.0
    %191 = vmatprep.subr.mxu0 0.0
    %192 = vmatpush1.msra.mxu0 0.0
    %193 = vmatprep.subr.mxu0 0.0
    %194 = vmatpush1.msra.mxu0 0.0
    %195 = vmatprep.subr.mxu0 0.0
    %196 = vmatpush1.msra.mxu0 0.0
    %197 = vmatprep.subr.mxu0 0.0
    %198 = vmatpush1.msra.mxu0 0.0
    %199 = vmatprep.subr.mxu0 0.0
    %200 = vmatpush1.msra.mxu0 0.0
    %201 = vmatprep.subr.mxu0 0.0
    %202 = vmatpush1.msra.mxu0 0.0
    %203 = vmatprep.subr.mxu0 0.0
    %204 = vmatpush1.msra.mxu0 0.0
    %205 = vmatprep.subr.mxu0 0.0
    %206 = vmatpush1.msra.mxu0 0.0
    %207 = vmatprep.subr.mxu0 0.0
    %208 = vmatpush1.msra.mxu0 0.0
    %209 = vmatprep.mubr.f32.mxu0 0.0
    %210 = vmatmul.mubr.f32.gmra.mrb[0].mxu0 %v143
    %v211 = vpop.f32.mrb[0].mxu0
    %v212 = vadd.f32 %v140, %v211
    %v213 = vpop.f32.mrb[0].mxu0
    %214 = vdwg.mxu0
    %vm215 = vcmp.gt.f32.partialorder %v212, 0.0
    %v216 = vmul.f32 %v212, 0.01
    %v217 = vsel %vm215, %v212, %v216
    %v218 = vld [vmem:[#allocation5 + $0x60] sm:$0xff]
    %v219 = vld [vmem:[#allocation5 + $0x68] sm:$0xff]
    %v220 = vld [vmem:[#allocation5 + $0xf2] sm:$0x1]
    %v221 = vlaneseq
    %v222 = vshrl.u32 %v221, 7
    %v223 = vsub.s32 0, %v222
    %v224 = vrot.slane %v220, %v223
    %vm225 = vcmask 130048
    %v227 = vsel %vm225, %v217, 0
    %229 = vmatprep.subr.mxu0 0.0
    %230 = vmatpush1.msra.mxu0 %v218
    %231 = vmatprep.subr.mxu0 0.0
    %232 = vmatpush1.msra.mxu0 %v219
    %233 = vmatprep.subr.mxu0 0.0
    %234 = vmatpush1.msra.mxu0 0.0
    %235 = vmatprep.subr.mxu0 0.0
    %236 = vmatpush1.msra.mxu0 0.0
    %237 = vmatprep.subr.mxu0 0.0
    %238 = vmatpush1.msra.mxu0 0.0
    %239 = vmatprep.subr.mxu0 0.0
    %240 = vmatpush1.msra.mxu0 0.0
    %241 = vmatprep.subr.mxu0 0.0
    %242 = vmatpush1.msra.mxu0 0.0
    %243 = vmatprep.subr.mxu0 0.0
    %244 = vmatpush1.msra.mxu0 0.0
    %245 = vmatprep.subr.mxu0 0.0
    %246 = vmatpush1.msra.mxu0 0.0
    %247 = vmatprep.subr.mxu0 0.0
    %248 = vmatpush1.msra.mxu0 0.0
    %249 = vmatprep.subr.mxu0 0.0
    %250 = vmatpush1.msra.mxu0 0.0
    %251 = vmatprep.subr.mxu0 0.0
    %252 = vmatpush1.msra.mxu0 0.0
    %253 = vmatprep.subr.mxu0 0.0
    %254 = vmatpush1.msra.mxu0 0.0
    %255 = vmatprep.subr.mxu0 0.0
    %256 = vmatpush1.msra.mxu0 0.0
    %257 = vmatprep.subr.mxu0 0.0
    %258 = vmatpush1.msra.mxu0 0.0
    %259 = vmatprep.subr.mxu0 0.0
    %260 = vmatpush1.msra.mxu0 0.0
    %261 = vmatprep.subr.mxu0 0.0
    %262 = vmatpush1.msra.mxu0 0.0
    %263 = vmatprep.subr.mxu0 0.0
    %264 = vmatpush1.msra.mxu0 0.0
    %265 = vmatprep.subr.mxu0 0.0
    %266 = vmatpush1.msra.mxu0 0.0
    %267 = vmatprep.subr.mxu0 0.0
    %268 = vmatpush1.msra.mxu0 0.0
    %269 = vmatprep.subr.mxu0 0.0
    %270 = vmatpush1.msra.mxu0 0.0
    %271 = vmatprep.subr.mxu0 0.0
    %272 = vmatpush1.msra.mxu0 0.0
    %273 = vmatprep.subr.mxu0 0.0
    %274 = vmatpush1.msra.mxu0 0.0
    %275 = vmatprep.subr.mxu0 0.0
    %276 = vmatpush1.msra.mxu0 0.0
    %277 = vmatprep.subr.mxu0 0.0
    %278 = vmatpush1.msra.mxu0 0.0
    %279 = vmatprep.subr.mxu0 0.0
    %280 = vmatpush1.msra.mxu0 0.0
    %281 = vmatprep.subr.mxu0 0.0
    %282 = vmatpush1.msra.mxu0 0.0
    %283 = vmatprep.subr.mxu0 0.0
    %284 = vmatpush1.msra.mxu0 0.0
    %285 = vmatprep.subr.mxu0 0.0
    %286 = vmatpush1.msra.mxu0 0.0
    %287 = vmatprep.subr.mxu0 0.0
    %288 = vmatpush1.msra.mxu0 0.0
    %289 = vmatprep.subr.mxu0 0.0
    %290 = vmatpush1.msra.mxu0 0.0
    %291 = vmatprep.subr.mxu0 0.0
    %292 = vmatpush1.msra.mxu0 0.0
    %293 = vmatprep.mubr.f32.mxu0 0.0
    %294 = vmatmul.mubr.f32.gmra.mrb[0].mxu0 %v227
    %v295 = vpop.f32.mrb[0].mxu0
    %v296 = vadd.f32 %v224, %v295
    %v297 = vpop.f32.mrb[0].mxu0
    %298 = vdwg.mxu0
    %vm299 = vcmp.gt.f32.partialorder %v296, 0.0
    %v300 = vmul.f32 %v296, 0.01
    %v301 = vsel %vm299, %v296, %v300
    %v302 = vld [vmem:[#allocation5 + $0x70] sm:$0xff]
    %v303 = vld [vmem:[#allocation5 + $0x78] sm:$0xff]
    %v304 = vld [vmem:[#allocation5 + $0x80] sm:$0xff]
    %v305 = vld [vmem:[#allocation5 + $0x88] sm:$0xff]
    %v306 = vld [vmem:[#allocation5 + $0xf3] sm:$0x1]
    %v307 = vlaneseq
    %v308 = vshrl.u32 %v307, 7
    %v309 = vsub.s32 0, %v308
    %v310 = vrot.slane %v306, %v309
    %v312 = vsel %vm141, %v301, 0
    %314 = vmatprep.subr.mxu0 0.0
    %315 = vmatpush1.msra.mxu0 %v302
    %316 = vmatprep.subr.mxu0 0.0
    %317 = vmatpush1.msra.mxu0 %v303
    %318 = vmatprep.subr.mxu0 0.0
    %319 = vmatpush1.msra.mxu0 %v304
    %320 = vmatprep.subr.mxu0 0.0
    %321 = vmatpush1.msra.mxu0 %v305
    %322 = vmatprep.subr.mxu0 0.0
    %323 = vmatpush1.msra.mxu0 0.0
    %324 = vmatprep.subr.mxu0 0.0
    %325 = vmatpush1.msra.mxu0 0.0
    %326 = vmatprep.subr.mxu0 0.0
    %327 = vmatpush1.msra.mxu0 0.0
    %328 = vmatprep.subr.mxu0 0.0
    %329 = vmatpush1.msra.mxu0 0.0
    %330 = vmatprep.subr.mxu0 0.0
    %331 = vmatpush1.msra.mxu0 0.0
    %332 = vmatprep.subr.mxu0 0.0
    %333 = vmatpush1.msra.mxu0 0.0
    %334 = vmatprep.subr.mxu0 0.0
    %335 = vmatpush1.msra.mxu0 0.0
    %336 = vmatprep.subr.mxu0 0.0
    %337 = vmatpush1.msra.mxu0 0.0
    %338 = vmatprep.subr.mxu0 0.0
    %339 = vmatpush1.msra.mxu0 0.0
    %340 = vmatprep.subr.mxu0 0.0
    %341 = vmatpush1.msra.mxu0 0.0
    %342 = vmatprep.subr.mxu0 0.0
    %343 = vmatpush1.msra.mxu0 0.0
    %344 = vmatprep.subr.mxu0 0.0
    %345 = vmatpush1.msra.mxu0 0.0
    %346 = vmatprep.subr.mxu0 0.0
    %347 = vmatpush1.msra.mxu0 0.0
    %348 = vmatprep.subr.mxu0 0.0
    %349 = vmatpush1.msra.mxu0 0.0
    %350 = vmatprep.subr.mxu0 0.0
    %351 = vmatpush1.msra.mxu0 0.0
    %352 = vmatprep.subr.mxu0 0.0
    %353 = vmatpush1.msra.mxu0 0.0
    %354 = vmatprep.subr.mxu0 0.0
    %355 = vmatpush1.msra.mxu0 0.0
    %356 = vmatprep.subr.mxu0 0.0
    %357 = vmatpush1.msra.mxu0 0.0
    %358 = vmatprep.subr.mxu0 0.0
    %359 = vmatpush1.msra.mxu0 0.0
    %360 = vmatprep.subr.mxu0 0.0
    %361 = vmatpush1.msra.mxu0 0.0
    %362 = vmatprep.subr.mxu0 0.0
    %363 = vmatpush1.msra.mxu0 0.0
    %364 = vmatprep.subr.mxu0 0.0
    %365 = vmatpush1.msra.mxu0 0.0
    %366 = vmatprep.subr.mxu0 0.0
    %367 = vmatpush1.msra.mxu0 0.0
    %368 = vmatprep.subr.mxu0 0.0
    %369 = vmatpush1.msra.mxu0 0.0
    %370 = vmatprep.subr.mxu0 0.0
    %371 = vmatpush1.msra.mxu0 0.0
    %372 = vmatprep.subr.mxu0 0.0
    %373 = vmatpush1.msra.mxu0 0.0
    %374 = vmatprep.subr.mxu0 0.0
    %375 = vmatpush1.msra.mxu0 0.0
    %376 = vmatprep.subr.mxu0 0.0
    %377 = vmatpush1.msra.mxu0 0.0
    %378 = vmatprep.mubr.f32.mxu0 0.0
    %379 = vmatmul.mubr.f32.gmra.mrb[0].mxu0 %v312
    %v380 = vpop.f32.mrb[0].mxu0
    %v381 = vadd.f32 %v310, %v380
    %v382 = vpop.f32.mrb[0].mxu0
    %383 = vdwg.mxu0
    %vm384 = vcmp.gt.f32.partialorder %v381, 0.0
    %v385 = vmul.f32 %v381, 0.01
    %v386 = vsel %vm384, %v381, %v385
    %v387 = vld [vmem:[#allocation5 + $0x90] sm:$0xff]
    %v388 = vld [vmem:[#allocation5 + $0x98] sm:$0xff]
    %v389 = vld [vmem:[#allocation5 + $0xf4] sm:$0x1]
    %v390 = vlaneseq
    %v391 = vshrl.u32 %v390, 7
    %v392 = vsub.s32 0, %v391
    %v393 = vrot.slane %v389, %v392
    %v395 = vsel %vm225, %v386, 0
    %397 = vmatprep.subr.mxu0 0.0
    %398 = vmatpush1.msra.mxu0 %v387
    %399 = vmatprep.subr.mxu0 0.0
    %400 = vmatpush1.msra.mxu0 %v388
    %401 = vmatprep.subr.mxu0 0.0
    %402 = vmatpush1.msra.mxu0 0.0
    %403 = vmatprep.subr.mxu0 0.0
    %404 = vmatpush1.msra.mxu0 0.0
    %405 = vmatprep.subr.mxu0 0.0
    %406 = vmatpush1.msra.mxu0 0.0
    %407 = vmatprep.subr.mxu0 0.0
    %408 = vmatpush1.msra.mxu0 0.0
    %409 = vmatprep.subr.mxu0 0.0
    %410 = vmatpush1.msra.mxu0 0.0
    %411 = vmatprep.subr.mxu0 0.0
    %412 = vmatpush1.msra.mxu0 0.0
    %413 = vmatprep.subr.mxu0 0.0
    %414 = vmatpush1.msra.mxu0 0.0
    %415 = vmatprep.subr.mxu0 0.0
    %416 = vmatpush1.msra.mxu0 0.0
    %417 = vmatprep.subr.mxu0 0.0
    %418 = vmatpush1.msra.mxu0 0.0
    %419 = vmatprep.subr.mxu0 0.0
    %420 = vmatpush1.msra.mxu0 0.0
    %421 = vmatprep.subr.mxu0 0.0
    %422 = vmatpush1.msra.mxu0 0.0
    %423 = vmatprep.subr.mxu0 0.0
    %424 = vmatpush1.msra.mxu0 0.0
    %425 = vmatprep.subr.mxu0 0.0
    %426 = vmatpush1.msra.mxu0 0.0
    %427 = vmatprep.subr.mxu0 0.0
    %428 = vmatpush1.msra.mxu0 0.0
    %429 = vmatprep.subr.mxu0 0.0
    %430 = vmatpush1.msra.mxu0 0.0
    %431 = vmatprep.subr.mxu0 0.0
    %432 = vmatpush1.msra.mxu0 0.0
    %433 = vmatprep.subr.mxu0 0.0
    %434 = vmatpush1.msra.mxu0 0.0
    %435 = vmatprep.subr.mxu0 0.0
    %436 = vmatpush1.msra.mxu0 0.0
    %437 = vmatprep.subr.mxu0 0.0
    %438 = vmatpush1.msra.mxu0 0.0
    %439 = vmatprep.subr.mxu0 0.0
    %440 = vmatpush1.msra.mxu0 0.0
    %441 = vmatprep.subr.mxu0 0.0
    %442 = vmatpush1.msra.mxu0 0.0
    %443 = vmatprep.subr.mxu0 0.0
    %444 = vmatpush1.msra.mxu0 0.0
    %445 = vmatprep.subr.mxu0 0.0
    %446 = vmatpush1.msra.mxu0 0.0
    %447 = vmatprep.subr.mxu0 0.0
    %448 = vmatpush1.msra.mxu0 0.0
    %449 = vmatprep.subr.mxu0 0.0
    %450 = vmatpush1.msra.mxu0 0.0
    %451 = vmatprep.subr.mxu0 0.0
    %452 = vmatpush1.msra.mxu0 0.0
    %453 = vmatprep.subr.mxu0 0.0
    %454 = vmatpush1.msra.mxu0 0.0
    %455 = vmatprep.subr.mxu0 0.0
    %456 = vmatpush1.msra.mxu0 0.0
    %457 = vmatprep.subr.mxu0 0.0
    %458 = vmatpush1.msra.mxu0 0.0
    %459 = vmatprep.subr.mxu0 0.0
    %460 = vmatpush1.msra.mxu0 0.0
    %461 = vmatprep.mubr.f32.mxu0 0.0
    %462 = vmatmul.mubr.f32.gmra.mrb[0].mxu0 %v395
    %v463 = vpop.f32.mrb[0].mxu0
    %v464 = vadd.f32 %v393, %v463
    %v465 = vpop.f32.mrb[0].mxu0
    %466 = vdwg.mxu0
    %vm467 = vcmp.gt.f32.partialorder %v464, 0.0
    %v468 = vmul.f32 %v464, 0.01
    %v469 = vsel %vm467, %v464, %v468
    %v470 = vld [vmem:[#allocation5 + $0xa0] sm:$0xff]
    %v471 = vld [vmem:[#allocation5 + $0xa8] sm:$0xff]
    %v472 = vld [vmem:[#allocation5 + $0xf5] sm:$0x1]
    %v473 = vlaneseq
    %v474 = vshrl.u32 %v473, 7
    %v475 = vsub.s32 0, %v474
    %v476 = vrot.slane %v472, %v475
    %478 = vrot.lane.b32.xlu0 %v469, 96
    %v479 = vpop.permute.xlu0 %478
    %v480 = vsel %vm225, %v479, 0
    %482 = vmatprep.subr.mxu0 0.0
    %483 = vmatpush1.msra.mxu0 %v470
    %484 = vmatprep.subr.mxu0 0.0
    %485 = vmatpush1.msra.mxu0 %v471
    %486 = vmatprep.subr.mxu0 0.0
    %487 = vmatpush1.msra.mxu0 0.0
    %488 = vmatprep.subr.mxu0 0.0
    %489 = vmatpush1.msra.mxu0 0.0
    %490 = vmatprep.subr.mxu0 0.0
    %491 = vmatpush1.msra.mxu0 0.0
    %492 = vmatprep.subr.mxu0 0.0
    %493 = vmatpush1.msra.mxu0 0.0
    %494 = vmatprep.subr.mxu0 0.0
    %495 = vmatpush1.msra.mxu0 0.0
    %496 = vmatprep.subr.mxu0 0.0
    %497 = vmatpush1.msra.mxu0 0.0
    %498 = vmatprep.subr.mxu0 0.0
    %499 = vmatpush1.msra.mxu0 0.0
    %500 = vmatprep.subr.mxu0 0.0
    %501 = vmatpush1.msra.mxu0 0.0
    %502 = vmatprep.subr.mxu0 0.0
    %503 = vmatpush1.msra.mxu0 0.0
    %504 = vmatprep.subr.mxu0 0.0
    %505 = vmatpush1.msra.mxu0 0.0
    %506 = vmatprep.subr.mxu0 0.0
    %507 = vmatpush1.msra.mxu0 0.0
    %508 = vmatprep.subr.mxu0 0.0
    %509 = vmatpush1.msra.mxu0 0.0
    %510 = vmatprep.subr.mxu0 0.0
    %511 = vmatpush1.msra.mxu0 0.0
    %512 = vmatprep.subr.mxu0 0.0
    %513 = vmatpush1.msra.mxu0 0.0
    %514 = vmatprep.subr.mxu0 0.0
    %515 = vmatpush1.msra.mxu0 0.0
    %516 = vmatprep.subr.mxu0 0.0
    %517 = vmatpush1.msra.mxu0 0.0
    %518 = vmatprep.subr.mxu0 0.0
    %519 = vmatpush1.msra.mxu0 0.0
    %520 = vmatprep.subr.mxu0 0.0
    %521 = vmatpush1.msra.mxu0 0.0
    %522 = vmatprep.subr.mxu0 0.0
    %523 = vmatpush1.msra.mxu0 0.0
    %524 = vmatprep.subr.mxu0 0.0
    %525 = vmatpush1.msra.mxu0 0.0
    %526 = vmatprep.subr.mxu0 0.0
    %527 = vmatpush1.msra.mxu0 0.0
    %528 = vmatprep.subr.mxu0 0.0
    %529 = vmatpush1.msra.mxu0 0.0
    %530 = vmatprep.subr.mxu0 0.0
    %531 = vmatpush1.msra.mxu0 0.0
    %532 = vmatprep.subr.mxu0 0.0
    %533 = vmatpush1.msra.mxu0 0.0
    %534 = vmatprep.subr.mxu0 0.0
    %535 = vmatpush1.msra.mxu0 0.0
    %536 = vmatprep.subr.mxu0 0.0
    %537 = vmatpush1.msra.mxu0 0.0
    %538 = vmatprep.subr.mxu0 0.0
    %539 = vmatpush1.msra.mxu0 0.0
    %540 = vmatprep.subr.mxu0 0.0
    %541 = vmatpush1.msra.mxu0 0.0
    %542 = vmatprep.subr.mxu0 0.0
    %543 = vmatpush1.msra.mxu0 0.0
    %544 = vmatprep.subr.mxu0 0.0
    %545 = vmatpush1.msra.mxu0 0.0
    %546 = vmatprep.mubr.f32.mxu0 0.0
    %547 = vmatmul.mubr.f32.gmra.mrb[0].mxu0 %v480
    %v548 = vpop.f32.mrb[0].mxu0
    %v549 = vadd.f32 %v476, %v548
    %v550 = vpop.f32.mrb[0].mxu0
    %551 = vdwg.mxu0
    %vm552 = vcmp.gt.f32.partialorder %v549, 0.0
    %v553 = vmul.f32 %v549, 0.01
    %v554 = vsel %vm552, %v549, %v553
    %556 = vrot.lane.b32.xlu0 %v554, 32
    %v557 = vpop.permute.xlu0 %556
    %v559 = vsel %vm141, %v469, %v557
    %v560 = vld [vmem:[#allocation5 + $0xb0] sm:$0xff]
    %v561 = vld [vmem:[#allocation5 + $0xb8] sm:$0xff]
    %v562 = vld [vmem:[#allocation5 + $0xc0] sm:$0xff]
    %v563 = vld [vmem:[#allocation5 + $0xc8] sm:$0xff]
    %v564 = vld [vmem:[#allocation5 + $0xd0] sm:$0xff]
    %v565 = vld [vmem:[#allocation5 + $0xd8] sm:$0xff]
    %v566 = vld [vmem:[#allocation5 + $0xe0] sm:$0xff]
    %v567 = vld [vmem:[#allocation5 + $0xe8] sm:$0xff]
    %v568 = vld [vmem:[#allocation5 + $0xf6] sm:$0x1]
    %v569 = vlaneseq
    %v570 = vshrl.u32 %v569, 7
    %v571 = vsub.s32 0, %v570
    %v572 = vrot.slane %v568, %v571
    %v574 = vsel %vm55, %v559, 0
    %576 = vmatprep.subr.mxu0 0.0
    %577 = vmatpush1.msra.mxu0 %v560
    %578 = vmatprep.subr.mxu0 0.0
    %579 = vmatpush1.msra.mxu0 %v561
    %580 = vmatprep.subr.mxu0 0.0
    %581 = vmatpush1.msra.mxu0 %v562
    %582 = vmatprep.subr.mxu0 0.0
    %583 = vmatpush1.msra.mxu0 %v563
    %584 = vmatprep.subr.mxu0 0.0
    %585 = vmatpush1.msra.mxu0 %v564
    %586 = vmatprep.subr.mxu0 0.0
    %587 = vmatpush1.msra.mxu0 %v565
    %588 = vmatprep.subr.mxu0 0.0
    %589 = vmatpush1.msra.mxu0 %v566
    %590 = vmatprep.subr.mxu0 0.0
    %591 = vmatpush1.msra.mxu0 %v567
    %592 = vmatprep.subr.mxu0 0.0
    %593 = vmatpush1.msra.mxu0 0.0
    %594 = vmatprep.subr.mxu0 0.0
    %595 = vmatpush1.msra.mxu0 0.0
    %596 = vmatprep.subr.mxu0 0.0
    %597 = vmatpush1.msra.mxu0 0.0
    %598 = vmatprep.subr.mxu0 0.0
    %599 = vmatpush1.msra.mxu0 0.0
    %600 = vmatprep.subr.mxu0 0.0
    %601 = vmatpush1.msra.mxu0 0.0
    %602 = vmatprep.subr.mxu0 0.0
    %603 = vmatpush1.msra.mxu0 0.0
    %604 = vmatprep.subr.mxu0 0.0
    %605 = vmatpush1.msra.mxu0 0.0
    %606 = vmatprep.subr.mxu0 0.0
    %607 = vmatpush1.msra.mxu0 0.0
    %608 = vmatprep.subr.mxu0 0.0
    %609 = vmatpush1.msra.mxu0 0.0
    %610 = vmatprep.subr.mxu0 0.0
    %611 = vmatpush1.msra.mxu0 0.0
    %612 = vmatprep.subr.mxu0 0.0
    %613 = vmatpush1.msra.mxu0 0.0
    %614 = vmatprep.subr.mxu0 0.0
    %615 = vmatpush1.msra.mxu0 0.0
    %616 = vmatprep.subr.mxu0 0.0
    %617 = vmatpush1.msra.mxu0 0.0
    %618 = vmatprep.subr.mxu0 0.0
    %619 = vmatpush1.msra.mxu0 0.0
    %620 = vmatprep.subr.mxu0 0.0
    %621 = vmatpush1.msra.mxu0 0.0
    %622 = vmatprep.subr.mxu0 0.0
    %623 = vmatpush1.msra.mxu0 0.0
    %624 = vmatprep.subr.mxu0 0.0
    %625 = vmatpush1.msra.mxu0 0.0
    %626 = vmatprep.subr.mxu0 0.0
    %627 = vmatpush1.msra.mxu0 0.0
    %628 = vmatprep.subr.mxu0 0.0
    %629 = vmatpush1.msra.mxu0 0.0
    %630 = vmatprep.subr.mxu0 0.0
    %631 = vmatpush1.msra.mxu0 0.0
    %632 = vmatprep.subr.mxu0 0.0
    %633 = vmatpush1.msra.mxu0 0.0
    %634 = vmatprep.subr.mxu0 0.0
    %635 = vmatpush1.msra.mxu0 0.0
    %636 = vmatprep.subr.mxu0 0.0
    %637 = vmatpush1.msra.mxu0 0.0
    %638 = vmatprep.subr.mxu0 0.0
    %639 = vmatpush1.msra.mxu0 0.0
    %640 = vmatprep.mubr.f32.mxu0 0.0
    %641 = vmatmul.mubr.f32.gmra.mrb[0].mxu0 %v574
    %v642 = vpop.f32.mrb[0].mxu0
    %v643 = vadd.f32 %v572, %v642
    %v644 = vpop.f32.mrb[0].mxu0
    %645 = vdwg.mxu0
    %v646 = vld [vmem:[#allocation5 + $0xf7] sm:$0x1]
    %v647 = vlaneseq
    %v648 = vshrl.u32 %v647, 7
    %v649 = vsub.s32 0, %v648
    %v650 = vrot.slane %v646, %v649
    %652 = vrot.lane.b32.xlu0 %v650, 48
    %v653 = vpop.permute.xlu0 %652
    %v655 = vmul.f32 %v469, %v653
    %657 = vrot.lane.b32.xlu0 %v655, 80
    %v658 = vpop.permute.xlu0 %657
    %vm660 = vcmask 64512
    %v661 = vsel %vm660, %v658, 0.0
    %662 = vadd.xlane.f32.xlu0 %v661
    %v663 = vpop.xlane.xlu0 %662
    %v664 = vld [vmem:[#allocation5 + $0xf8] sm:$0x1]
    %v665 = vlaneseq
    %v666 = vshrl.u32 %v665, 7
    %v667 = vsub.s32 0, %v666
    %v668 = vrot.slane %v664, %v667
    %v669 = vadd.f32 %v663, %v668
    %v670 = vmax.f32 %v669, 0.0
    %671 = vst [vmem:[#allocation7] sm:$0xff] %v643
    %673 = vrot.lane.b32.xlu0 %v670, 16
    %v674 = vpop.permute.xlu0 %673
    %v676 = vsel %vm225, %v386, %v674
    %vm677 = vcmask 138240
    %678 = vst.msk [vmem:[#allocation8] sm:$0xff] %vm677, %v676
    // Predicated region
    $region18: #{tpu_custom_call.1} parent=1 // pred_check
      _
    $region19: #{tpu_custom_call.1} parent=1 // pred_check_branch
      %680 = sbr.rel (0) target = $region21
    $region20: #{tpu_custom_call.1} parent=1 // pred_region
      %s682 = ssub.s32 128, 128
      %683 = vsyncadd [#allocation4], %s682
      %s685 = sshll.u32 [#allocation7], 4
      %s686 = int_to_ptr.vmem [resolvable:$true] %s685
      %688 = dma.vmem_to_hbm [thread:$0]  %s686, 128, %s2, [#allocation4]
    $region21: #{tpu_custom_call.1} parent=1 // pred_fallthru
      _
    // Predicated region
    $region22: #{tpu_custom_call.1} parent=1 // pred_check
      _
    $region23: #{tpu_custom_call.1} parent=1 // pred_check_branch
      %690 = sbr.rel (0) target = $region25
    $region24: #{tpu_custom_call.1} parent=1 // pred_region
      %s692 = ssub.s32 128, 128
      %693 = vsyncadd [#allocation9], %s692
      %s695 = sshll.u32 [#allocation8], 4
      %s696 = int_to_ptr.vmem [resolvable:$true] %s695
      %698 = dma.vmem_to_hbm [thread:$0]  %s696, 128, %s3, [#allocation9]
    $region25: #{tpu_custom_call.1} parent=1 // pred_fallthru
      _
    // Predicated region
    $region26: #{tpu_custom_call.1} parent=1 // pred_check
      _
    $region27: #{tpu_custom_call.1} parent=1 // pred_check_branch
      %700 = sbr.rel (0) target = $region29
    $region28: #{tpu_custom_call.1} parent=1 // pred_region
      %701 = dma.done [#allocation4], 128
    $region29: #{tpu_custom_call.1} parent=1 // pred_fallthru
      _
    // Predicated region
    $region30: #{tpu_custom_call.1} parent=1 // pred_check
      _
    $region31: #{tpu_custom_call.1} parent=1 // pred_check_branch
      %703 = sbr.rel (0) target = $region33
    $region32: #{tpu_custom_call.1} parent=1 // pred_region
      %704 = dma.done [#allocation9], 128
    $region33: #{tpu_custom_call.1} parent=1 // pred_fallthru
      _
    %705 = vsyncpa [#allocation3], 1
    %706 = vsyncpa [#allocation6], 1
    %707 = vsyncpa [#allocation4], 1
    %708 = vsyncpa [#allocation9], 1

</llo_original>
